<compile_context>
chip_gen: v5e
topology: v5e:2x2
jax: 0.10.0
libtpu: 0.0.40
codegen_flags: <defaults>
</compile_context>

<pallas_src>
import functools
from collections import namedtuple

import numpy as np

import jax
import jax.numpy as jnp
from jax.experimental import pallas as pl
from jax.experimental.pallas import tpu as pltpu


_SEG = 128  # lane segment width used for the packed parameter slab

LayerMeta = namedtuple("LayerMeta", "fin wc wal hm H D gate_col")


# ----------------------------------------------------------------------------
# Fused whole-forward kernel.
# ----------------------------------------------------------------------------
def _gat_forward_kernel(x_ref, mask_ref, slab_ref, o_ref, *,
                        n_layers, neg_slope, meta, lb_off, seg):
    f32 = jnp.float32

    mask_bias = mask_ref[...].astype(f32)                        # [N, N] 0 / -1e30
    # Zero-in-degree guard derived from the mask (one lane reduce, no extra DMA).
    row_valid = (jnp.max(mask_bias, axis=-1, keepdims=True) > -1e20).astype(f32)

    h = x_ref[...].astype(f32)
    pred_sum = jnp.zeros((1, seg), f32)                          # lane-dense accumulator

    for layer in range(n_layers + 1):
        lm = meta[layer]
        fin = lm.fin

        # ---- ONE combined projection matmul for this layer ----
        wc = slab_ref[lm.wc:lm.wc + fin, :]                      # [fin, 2*seg]
        proj = jnp.dot(h, wc, preferred_element_type=f32)        # [N, 2*seg]

        # ---- GlobalAttentionPooling + linears_prediction[layer] (fused) ----
        gate = proj[:, lm.gate_col:lm.gate_col + 1]              # [N, 1] (gate_b dropped)
        gmax = jnp.max(gate, axis=0, keepdims=True)
        gexp = jnp.exp(gate - gmax)
        alpha = gexp / jnp.sum(gexp, axis=0, keepdims=True)      # [N, 1]
        # pooled @ lin_w == sum_n alpha_n * (h @ lin_w)_n; lin_w columns live in
        # the second 128-lane segment of the combined projection (zero padded).
        pred_sum = pred_sum + jnp.sum(alpha * proj[:, seg:2 * seg],
                                      axis=0, keepdims=True)     # [1, seg]

        if layer == n_layers:
            break  # last GATConv's output is never consumed by forward()

        # ---- GATConv[layer] ----
        H, D = lm.H, lm.D
        HD = H * D
        feat = proj[:, :HD]                                      # [N, H*D]
        er = proj[:, HD:HD + H]                                  # [N, H]
        walT = slab_ref[lm.wal:lm.wal + H, :fin]                 # [H, fin]
        # el for all heads directly in [H, N_src] layout (no feature transpose).
        elT = jnp.einsum("hf,uf->hu", walT, h,
                         preferred_element_type=f32)             # [H, N]
        hmask = slab_ref[lm.hm:lm.hm + H, :HD]                   # [H, H*D]

        acc = None
        for hd in range(H):                                      # static, tiny
            e = er[:, hd:hd + 1] + elT[hd:hd + 1, :]             # [N_dst, N_src]
            e = jnp.where(e > 0.0, e, neg_slope * e) + mask_bias  # LeakyReLU + mask
            emax = jnp.max(e, axis=-1, keepdims=True)
            p = jnp.exp(e - emax)                                # masked -> exactly 0
            a = p / jnp.sum(p, axis=-1, keepdims=True)
            # Head mask on the OPERAND keeps the accumulation a clean dot chain.
            d = jnp.dot(a, feat * hmask[hd:hd + 1, :],
                        preferred_element_type=f32)              # [N, H*D]
            acc = d if acc is None else acc + d

        out = acc * row_valid                                    # no in-edges -> 0
        # ELU (exp only on the <=0 branch); all consumed GATConv layers use it.
        h = jnp.where(out > 0.0, out, jnp.exp(jnp.minimum(out, 0.0)) - 1.0)

    lb = slab_ref[lb_off:lb_off + 1, :seg]                       # pre-summed lin_b
    o_ref[...] = ((pred_sum + lb) * (1.0 / (n_layers + 1))).astype(o_ref.dtype)


# ----------------------------------------------------------------------------
# Host-side parameter packing: everything into one zero-padded [R, 256] slab.
# ----------------------------------------------------------------------------
def _pack_params(params, n_layers, out_dim):
    """Per consumed GATConv layer the slab holds (row offsets multiples of 8):
         Wc   [fin, 256]: cols [0:H*D)          = fc weight W
                          cols [H*D:H*D+H)      = W @ blockdiag(attn_r)  (-> er)
                          col  [H*D+H]          = pooling gate weight
                          cols [128:128+out)    = prediction lin_w
         walT [H, fin]   : (W @ blockdiag(attn_l)).T                    (-> el)
         hmask[H, H*D]   : per-head column selector
       The final layer only contributes gate/lin_w columns.  All lin_b biases
       are pre-summed into one row; gate_b is dropped (softmax shift-invariant).
    """
    assert out_dim <= _SEG
    width = 2 * _SEG
    blocks, meta = [], []
    row = 0

    def add(mat):
        nonlocal row
        r, c = mat.shape
        rp = ((r + 7) // 8) * 8
        blk = np.zeros((rp, width), np.float32)
        blk[:r, :c] = mat
        blocks.append(blk)
        off = row
        row += rp
        return off

    lb_sum = np.zeros((1, out_dim), np.float32)
    for layer, p in enumerate(params):
        lin_w = np.asarray(p["lin_w"], np.float32)
        fin = int(lin_w.shape[0])
        lb_sum = lb_sum + np.asarray(p["lin_b"], np.float32).reshape(1, out_dim)
        gate_w = np.asarray(p["gate_w"], np.float32).reshape(fin, 1)

        if layer == n_layers:
            wc = np.zeros((fin, width), np.float32)
            wc[:, 0:1] = gate_w
            wc[:, _SEG:_SEG + out_dim] = lin_w
            meta.append(LayerMeta(fin=fin, wc=add(wc), wal=0, hm=0,
                                  H=0, D=0, gate_col=0))
            break

        W = np.asarray(p["W"], np.float32)
        attn_l = np.asarray(p["attn_l"], np.float32)
        attn_r = np.asarray(p["attn_r"], np.float32)
        H, D = (int(s) for s in attn_l.shape)
        HD = H * D
        assert HD + H + 1 <= _SEG, "first lane segment overflow"
        eye = np.eye(H, dtype=np.float32)
        al_bd = (attn_l[:, :, None] * eye[:, None, :]).reshape(HD, H)
        ar_bd = (attn_r[:, :, None] * eye[:, None, :]).reshape(HD, H)

        wc = np.zeros((fin, width), np.float32)
        wc[:, :HD] = W
        wc[:, HD:HD + H] = W @ ar_bd
        wc[:, HD + H:HD + H + 1] = gate_w
        wc[:, _SEG:_SEG + out_dim] = lin_w
        wc_off = add(wc)
        wal_off = add((W @ al_bd).T)                 # [H, fin]
        hm_off = add(np.repeat(eye, D, axis=1))      # [H, H*D]
        meta.append(LayerMeta(fin=fin, wc=wc_off, wal=wal_off, hm=hm_off,
                              H=H, D=D, gate_col=HD + H))

    lb_off = add(lb_sum)
    slab = jnp.asarray(np.concatenate(blocks, axis=0))
    return slab, tuple(meta), lb_off


# ----------------------------------------------------------------------------
# Wrapper: build mask + slab, launch the single fused kernel.
# ----------------------------------------------------------------------------
def gat_forward(x, adj, params, *, n_layers, neg_slope):
    out_dim = int(params[0]["lin_w"].shape[1])
    slab, meta, lb_off = _pack_params(params, n_layers, out_dim)
    # Host-precomputed additive softmax mask; adj itself never enters the kernel.
    mask_bias = jnp.where(adj > 0, 0.0, -1e30).astype(jnp.float32)

    kern = functools.partial(_gat_forward_kernel, n_layers=n_layers,
                             neg_slope=neg_slope, meta=meta, lb_off=lb_off,
                             seg=_SEG)

    args = (x.astype(jnp.float32), mask_bias, slab)

    def full_spec(a):
        zeros = (0,) * a.ndim
        return pl.BlockSpec(a.shape, lambda i, _z=zeros: _z)

    # Rough cost hints so XLA can schedule around the single custom call.
    N = int(x.shape[0])
    flops, trans = 0, 0
    for lm in meta:
        flops += 2 * N * lm.fin * 2 * _SEG + 2 * N * _SEG       # projection + pooled
        trans += N
        if lm.H:
            HD = lm.H * lm.D
            flops += 2 * lm.H * N * lm.fin                       # elT
            flops += lm.H * (2 * N * N * HD + 6 * N * N)         # softmax + aggregation
            trans += lm.H * N * N
    bytes_accessed = sum(int(a.size) * a.dtype.itemsize for a in args) + 4 * _SEG

    out = pl.pallas_call(
        kern,
        out_shape=jax.ShapeDtypeStruct((1, _SEG), jnp.float32),
        grid=(1,),
        in_specs=[full_spec(a) for a in args],
        out_specs=pl.BlockSpec((1, _SEG), lambda i: (0, 0)),
        compiler_params=pltpu.CompilerParams(dimension_semantics=("arbitrary",)),
        cost_estimate=pl.CostEstimate(flops=int(flops), transcendentals=int(trans),
                                      bytes_accessed=int(bytes_accessed)),
    )(*args)
    return out[:, :out_dim]


# ----------------------------------------------------------------------------
# Pure NumPy (float64) reference of the original module's forward.
# ----------------------------------------------------------------------------
def _reference_forward(x, adj, params, *, n_layers, neg_slope):
    h = np.asarray(x, np.float64)
    A = np.asarray(adj, np.float64)
    preds = []
    for l, p in enumerate(params):
        gate = h @ np.asarray(p["gate_w"], np.float64) + np.asarray(p["gate_b"], np.float64)
        gate = gate - gate.max()
        a = np.exp(gate)
        a = a / a.sum()
        pooled = (a * h).sum(axis=0, keepdims=True)
        preds.append(pooled @ np.asarray(p["lin_w"], np.float64)
                     + np.asarray(p["lin_b"], np.float64))
        if l == n_layers:
            break
        W = np.asarray(p["W"], np.float64)
        al = np.asarray(p["attn_l"], np.float64)
        ar = np.asarray(p["attn_r"], np.float64)
        H, D = al.shape
        Nn = h.shape[0]
        feat = (h @ W).reshape(Nn, H, D)
        el = (feat * al[None]).sum(-1)                       # [N, H]
        er = (feat * ar[None]).sum(-1)                       # [N, H]
        outs = np.zeros((Nn, H, D))
        for hd in range(H):
            e = er[:, hd][:, None] + el[:, hd][None, :]      # [dst, src]
            e = np.where(e > 0, e, neg_slope * e)
            e = np.where(A > 0, e, -np.inf)
            m = e.max(axis=-1, keepdims=True)
            m = np.where(np.isfinite(m), m, 0.0)
            w = np.where(A > 0, np.exp(e - m), 0.0)
            s = w.sum(-1, keepdims=True)
            attn = np.where(s > 0, w / np.where(s > 0, s, 1.0), 0.0)
            outs[:, hd, :] = attn @ feat[:, hd, :]
        out = outs.reshape(Nn, H * D)
        h = np.where(out > 0, out, np.exp(np.minimum(out, 0.0)) - 1.0)  # ELU
    return np.stack(preds).mean(0)


if __name__ == "__main__":
    key = jax.random.PRNGKey(0)

    # Model hyperparameters (matching GAT.__init__ conventions; activation=ELU)
    n_layers = 2
    in_dim, hidden_dim, out_dim = 16, 8, 4
    heads = [2, 2, 1]           # len == n_layers + 1
    negative_slope = 0.2
    N = 16                      # nodes in the (single) graph

    # Per-layer input dims: layer 0 takes in_dim, layer l takes hidden*heads[l-1]
    layer_in = [in_dim] + [hidden_dim * heads[l - 1] for l in range(1, n_layers + 1)]
    layer_out = [hidden_dim] * n_layers + [out_dim]

    # Deterministic parameter init (synthetic; no checkpoint load)
    params = []
    k = key
    for i in range(n_layers + 1):
        fi, fo, H = layer_in[i], layer_out[i], heads[i]
        k, k1, k2, k3, k4, k5 = jax.random.split(k, 6)
        params.append(dict(
            W=0.2 * jax.random.normal(k1, (fi, H * fo), jnp.float32),      # GATConv fc (no bias)
            attn_l=0.2 * jax.random.normal(k2, (H, fo), jnp.float32),
            attn_r=0.2 * jax.random.normal(k3, (H, fo), jnp.float32),
            gate_w=0.2 * jax.random.normal(k4, (fi, 1), jnp.float32),      # pooling gate_nn
            gate_b=jnp.zeros((1, 1), jnp.float32),   # exists in module; no-op for softmax
            lin_w=0.2 * jax.random.normal(k5, (fi, out_dim), jnp.float32), # linears_prediction
            lin_b=jnp.zeros((1, out_dim), jnp.float32),
        ))

    # Graph: dense adjacency, adj[v, u] = 1 if edge u -> v, self-loops added
    k, ka, kx = jax.random.split(k, 3)
    adj = (jax.random.uniform(ka, (N, N)) < 0.3).astype(jnp.float32)
    adj = jnp.maximum(adj, jnp.eye(N, dtype=jnp.float32))

    # Node features g.ndata['feat']
    x = jax.random.normal(kx, (N, in_dim), jnp.float32)

    out = gat_forward(x, adj, params, n_layers=n_layers, neg_slope=negative_slope)
    out = jax.block_until_ready(out)
    assert out.shape == (1, out_dim) and bool(jnp.all(jnp.isfinite(out)))

    ref = _reference_forward(np.asarray(x), np.asarray(adj), params,
                             n_layers=n_layers, neg_slope=negative_slope)
    assert np.allclose(np.asarray(out), ref, rtol=2e-2, atol=1e-3), (np.asarray(out), ref)

    print("KERNEL_OK")
</pallas_src>

<mosaic_0001>
module attributes {stable_mosaic.version = 11 : i64} {
  func.func @_gat_forward_kernel(%arg0: i32, %arg1: memref<16x16xf32, #tpu.memory_space<vmem>>, %arg2: memref<16x16xf32, #tpu.memory_space<vmem>>, %arg3: memref<88x256xf32, #tpu.memory_space<vmem>>, %arg4: memref<1x128xf32, #tpu.memory_space<vmem>>) attributes {dimension_semantics = [#tpu.dimension_semantics<arbitrary>], iteration_bounds = array<i64: 1>, scalar_prefetch = 0 : i64, scratch_operands = 0 : i64, tpu.core_type = #tpu.core_type<tc>, window_params = [{pipeline_mode = #tpu.pipeline_mode<synchronous>, transform_indices = @transform_0, window_bounds = array<i64: 16, 16>}, {pipeline_mode = #tpu.pipeline_mode<synchronous>, transform_indices = @transform_1, window_bounds = array<i64: 16, 16>}, {pipeline_mode = #tpu.pipeline_mode<synchronous>, transform_indices = @transform_2, window_bounds = array<i64: 88, 256>}, {pipeline_mode = #tpu.pipeline_mode<synchronous>, transform_indices = @transform_3, window_bounds = array<i64: 1, 128>}]} {
    %c0 = arith.constant 0 : index
    %c0_0 = arith.constant 0 : index
    %0 = vector.load %arg2[%c0, %c0_0] : memref<16x16xf32, #tpu.memory_space<vmem>>, vector<16x16xf32>
    %cst = arith.constant dense<0xFF800000> : vector<16xf32>
    %1 = vector.multi_reduction <maximumf>, %0, %cst [1] : vector<16x16xf32> to vector<16xf32>
    %2 = vector.shape_cast %1 : vector<16xf32> to vector<16x1xf32>
    %cst_1 = arith.constant -1.000000e+20 : f32
    %3 = vector.broadcast %cst_1 : f32 to vector<16x1xf32>
    %4 = arith.cmpf ogt, %2, %3 : vector<16x1xf32>
    %5 = arith.extui %4 : vector<16x1xi1> to vector<16x1xi32>
    %6 = arith.sitofp %5 : vector<16x1xi32> to vector<16x1xf32>
    %c0_2 = arith.constant 0 : index
    %c0_3 = arith.constant 0 : index
    %7 = vector.load %arg1[%c0_2, %c0_3] : memref<16x16xf32, #tpu.memory_space<vmem>>, vector<16x16xf32>
    %cst_4 = arith.constant 0.000000e+00 : f32
    %8 = vector.broadcast %cst_4 : f32 to vector<1x128xf32>
    %c0_5 = arith.constant 0 : index
    %c0_6 = arith.constant 0 : index
    %9 = vector.load %arg3[%c0_5, %c0_6] : memref<88x256xf32, #tpu.memory_space<vmem>>, vector<16x256xf32>
    %cst_7 = arith.constant dense<0.000000e+00> : vector<16x256xf32>
    %10 = tpu.matmul %7, %9, %cst_7 {dimension_numbers = #tpu.dot_dimension_numbers<[1], [0], [0], [1], [0, 0, 1, 1], [], []>} : vector<16x16xf32>, vector<16x256xf32>, vector<16x256xf32> -> vector<16x256xf32>
    %11 = vector.extract_strided_slice %10 {offsets = [0, 18], sizes = [16, 1], strides = [1, 1]} : vector<16x256xf32> to vector<16x1xf32>
    %cst_8 = arith.constant dense<0xFF800000> : vector<1xf32>
    %12 = vector.multi_reduction <maximumf>, %11, %cst_8 [0] : vector<16x1xf32> to vector<1xf32>
    %13 = vector.shape_cast %12 : vector<1xf32> to vector<1x1xf32>
    %14 = vector.broadcast %13 : vector<1x1xf32> to vector<16x1xf32>
    %15 = arith.subf %11, %14 : vector<16x1xf32>
    %16 = math.exp %15 : vector<16x1xf32>
    %cst_9 = arith.constant dense<0.000000e+00> : vector<1xf32>
    %17 = vector.multi_reduction <add>, %16, %cst_9 [0] : vector<16x1xf32> to vector<1xf32>
    %18 = vector.shape_cast %17 : vector<1xf32> to vector<1x1xf32>
    %19 = vector.broadcast %18 : vector<1x1xf32> to vector<16x1xf32>
    %20 = arith.divf %16, %19 : vector<16x1xf32>
    %21 = vector.extract_strided_slice %10 {offsets = [0, 128], sizes = [16, 128], strides = [1, 1]} : vector<16x256xf32> to vector<16x128xf32>
    %22 = vector.broadcast %20 : vector<16x1xf32> to vector<16x128xf32>
    %23 = arith.mulf %22, %21 : vector<16x128xf32>
    %cst_10 = arith.constant dense<0.000000e+00> : vector<128xf32>
    %24 = vector.multi_reduction <add>, %23, %cst_10 [0] : vector<16x128xf32> to vector<128xf32>
    %25 = vector.shape_cast %24 : vector<128xf32> to vector<1x128xf32>
    %26 = arith.addf %8, %25 : vector<1x128xf32>
    %27 = vector.extract_strided_slice %10 {offsets = [0, 0], sizes = [16, 16], strides = [1, 1]} : vector<16x256xf32> to vector<16x16xf32>
    %28 = vector.extract_strided_slice %10 {offsets = [0, 16], sizes = [16, 2], strides = [1, 1]} : vector<16x256xf32> to vector<16x2xf32>
    %c16 = arith.constant 16 : index
    %c0_11 = arith.constant 0 : index
    %29 = vector.load %arg3[%c16, %c0_11] : memref<88x256xf32, #tpu.memory_space<vmem>>, vector<2x16xf32>
    "tpu.trace_start"() <{level = 10 : i32, message = "hf,uf->hu"}> : () -> ()
    %cst_12 = arith.constant dense<0.000000e+00> : vector<2x16xf32>
    %30 = tpu.matmul %29, %7, %cst_12 {dimension_numbers = #tpu.dot_dimension_numbers<[1], [1], [0], [0], [0, 0, 1, 0], [], []>} : vector<2x16xf32>, vector<16x16xf32>, vector<2x16xf32> -> vector<2x16xf32>
    "tpu.trace_stop"() : () -> ()
    %c24 = arith.constant 24 : index
    %c0_13 = arith.constant 0 : index
    %31 = vector.load %arg3[%c24, %c0_13] : memref<88x256xf32, #tpu.memory_space<vmem>>, vector<2x16xf32>
    %32 = vector.extract_strided_slice %28 {offsets = [0, 0], sizes = [16, 1], strides = [1, 1]} : vector<16x2xf32> to vector<16x1xf32>
    %33 = vector.extract_strided_slice %30 {offsets = [0, 0], sizes = [1, 16], strides = [1, 1]} : vector<2x16xf32> to vector<1x16xf32>
    %34 = vector.broadcast %32 : vector<16x1xf32> to vector<16x16xf32>
    %35 = vector.broadcast %33 : vector<1x16xf32> to vector<16x16xf32>
    %36 = arith.addf %34, %35 : vector<16x16xf32>
    %cst_14 = arith.constant 0.000000e+00 : f32
    %37 = vector.broadcast %cst_14 : f32 to vector<16x16xf32>
    %38 = arith.cmpf ogt, %36, %37 : vector<16x16xf32>
    %cst_15 = arith.constant 2.000000e-01 : f32
    %39 = vector.broadcast %cst_15 : f32 to vector<16x16xf32>
    %40 = arith.mulf %39, %36 : vector<16x16xf32>
    %41 = arith.select %38, %36, %40 : vector<16x16xi1>, vector<16x16xf32>
    %42 = arith.addf %41, %0 : vector<16x16xf32>
    %cst_16 = arith.constant dense<0xFF800000> : vector<16xf32>
    %43 = vector.multi_reduction <maximumf>, %42, %cst_16 [1] : vector<16x16xf32> to vector<16xf32>
    %44 = vector.shape_cast %43 : vector<16xf32> to vector<16x1xf32>
    %45 = vector.broadcast %44 : vector<16x1xf32> to vector<16x16xf32>
    %46 = arith.subf %42, %45 : vector<16x16xf32>
    %47 = math.exp %46 : vector<16x16xf32>
    %cst_17 = arith.constant dense<0.000000e+00> : vector<16xf32>
    %48 = vector.multi_reduction <add>, %47, %cst_17 [1] : vector<16x16xf32> to vector<16xf32>
    %49 = vector.shape_cast %48 : vector<16xf32> to vector<16x1xf32>
    %50 = vector.broadcast %49 : vector<16x1xf32> to vector<16x16xf32>
    %51 = arith.divf %47, %50 : vector<16x16xf32>
    %52 = vector.extract_strided_slice %31 {offsets = [0, 0], sizes = [1, 16], strides = [1, 1]} : vector<2x16xf32> to vector<1x16xf32>
    %53 = vector.broadcast %52 : vector<1x16xf32> to vector<16x16xf32>
    %54 = arith.mulf %27, %53 : vector<16x16xf32>
    %cst_18 = arith.constant dense<0.000000e+00> : vector<16x16xf32>
    %55 = tpu.matmul %51, %54, %cst_18 {dimension_numbers = #tpu.dot_dimension_numbers<[1], [0], [0], [1], [0, 0, 1, 1], [], []>} : vector<16x16xf32>, vector<16x16xf32>, vector<16x16xf32> -> vector<16x16xf32>
    %56 = vector.extract_strided_slice %28 {offsets = [0, 1], sizes = [16, 1], strides = [1, 1]} : vector<16x2xf32> to vector<16x1xf32>
    %57 = vector.extract_strided_slice %30 {offsets = [1, 0], sizes = [1, 16], strides = [1, 1]} : vector<2x16xf32> to vector<1x16xf32>
    %58 = vector.broadcast %56 : vector<16x1xf32> to vector<16x16xf32>
    %59 = vector.broadcast %57 : vector<1x16xf32> to vector<16x16xf32>
    %60 = arith.addf %58, %59 : vector<16x16xf32>
    %cst_19 = arith.constant 0.000000e+00 : f32
    %61 = vector.broadcast %cst_19 : f32 to vector<16x16xf32>
    %62 = arith.cmpf ogt, %60, %61 : vector<16x16xf32>
    %cst_20 = arith.constant 2.000000e-01 : f32
    %63 = vector.broadcast %cst_20 : f32 to vector<16x16xf32>
    %64 = arith.mulf %63, %60 : vector<16x16xf32>
    %65 = arith.select %62, %60, %64 : vector<16x16xi1>, vector<16x16xf32>
    %66 = arith.addf %65, %0 : vector<16x16xf32>
    %cst_21 = arith.constant dense<0xFF800000> : vector<16xf32>
    %67 = vector.multi_reduction <maximumf>, %66, %cst_21 [1] : vector<16x16xf32> to vector<16xf32>
    %68 = vector.shape_cast %67 : vector<16xf32> to vector<16x1xf32>
    %69 = vector.broadcast %68 : vector<16x1xf32> to vector<16x16xf32>
    %70 = arith.subf %66, %69 : vector<16x16xf32>
    %71 = math.exp %70 : vector<16x16xf32>
    %cst_22 = arith.constant dense<0.000000e+00> : vector<16xf32>
    %72 = vector.multi_reduction <add>, %71, %cst_22 [1] : vector<16x16xf32> to vector<16xf32>
    %73 = vector.shape_cast %72 : vector<16xf32> to vector<16x1xf32>
    %74 = vector.broadcast %73 : vector<16x1xf32> to vector<16x16xf32>
    %75 = arith.divf %71, %74 : vector<16x16xf32>
    %76 = vector.extract_strided_slice %31 {offsets = [1, 0], sizes = [1, 16], strides = [1, 1]} : vector<2x16xf32> to vector<1x16xf32>
    %77 = vector.broadcast %76 : vector<1x16xf32> to vector<16x16xf32>
    %78 = arith.mulf %27, %77 : vector<16x16xf32>
    %cst_23 = arith.constant dense<0.000000e+00> : vector<16x16xf32>
    %79 = tpu.matmul %75, %78, %cst_23 {dimension_numbers = #tpu.dot_dimension_numbers<[1], [0], [0], [1], [0, 0, 1, 1], [], []>} : vector<16x16xf32>, vector<16x16xf32>, vector<16x16xf32> -> vector<16x16xf32>
    %80 = arith.addf %55, %79 : vector<16x16xf32>
    %81 = vector.broadcast %6 : vector<16x1xf32> to vector<16x16xf32>
    %82 = arith.mulf %80, %81 : vector<16x16xf32>
    %cst_24 = arith.constant 0.000000e+00 : f32
    %83 = vector.broadcast %cst_24 : f32 to vector<16x16xf32>
    %84 = arith.cmpf ogt, %82, %83 : vector<16x16xf32>
    %cst_25 = arith.constant 0.000000e+00 : f32
    %85 = vector.broadcast %cst_25 : f32 to vector<16x16xf32>
    %86 = arith.minimumf %82, %85 : vector<16x16xf32>
    %87 = math.exp %86 : vector<16x16xf32>
    %cst_26 = arith.constant 1.000000e+00 : f32
    %88 = vector.broadcast %cst_26 : f32 to vector<16x16xf32>
    %89 = arith.subf %87, %88 : vector<16x16xf32>
    %90 = arith.select %84, %82, %89 : vector<16x16xi1>, vector<16x16xf32>
    %c32 = arith.constant 32 : index
    %c0_27 = arith.constant 0 : index
    %91 = vector.load %arg3[%c32, %c0_27] : memref<88x256xf32, #tpu.memory_space<vmem>>, vector<16x256xf32>
    %cst_28 = arith.constant dense<0.000000e+00> : vector<16x256xf32>
    %92 = tpu.matmul %90, %91, %cst_28 {dimension_numbers = #tpu.dot_dimension_numbers<[1], [0], [0], [1], [0, 0, 1, 1], [], []>} : vector<16x16xf32>, vector<16x256xf32>, vector<16x256xf32> -> vector<16x256xf32>
    %93 = vector.extract_strided_slice %92 {offsets = [0, 18], sizes = [16, 1], strides = [1, 1]} : vector<16x256xf32> to vector<16x1xf32>
    %cst_29 = arith.constant dense<0xFF800000> : vector<1xf32>
    %94 = vector.multi_reduction <maximumf>, %93, %cst_29 [0] : vector<16x1xf32> to vector<1xf32>
    %95 = vector.shape_cast %94 : vector<1xf32> to vector<1x1xf32>
    %96 = vector.broadcast %95 : vector<1x1xf32> to vector<16x1xf32>
    %97 = arith.subf %93, %96 : vector<16x1xf32>
    %98 = math.exp %97 : vector<16x1xf32>
    %cst_30 = arith.constant dense<0.000000e+00> : vector<1xf32>
    %99 = vector.multi_reduction <add>, %98, %cst_30 [0] : vector<16x1xf32> to vector<1xf32>
    %100 = vector.shape_cast %99 : vector<1xf32> to vector<1x1xf32>
    %101 = vector.broadcast %100 : vector<1x1xf32> to vector<16x1xf32>
    %102 = arith.divf %98, %101 : vector<16x1xf32>
    %103 = vector.extract_strided_slice %92 {offsets = [0, 128], sizes = [16, 128], strides = [1, 1]} : vector<16x256xf32> to vector<16x128xf32>
    %104 = vector.broadcast %102 : vector<16x1xf32> to vector<16x128xf32>
    %105 = arith.mulf %104, %103 : vector<16x128xf32>
    %cst_31 = arith.constant dense<0.000000e+00> : vector<128xf32>
    %106 = vector.multi_reduction <add>, %105, %cst_31 [0] : vector<16x128xf32> to vector<128xf32>
    %107 = vector.shape_cast %106 : vector<128xf32> to vector<1x128xf32>
    %108 = arith.addf %26, %107 : vector<1x128xf32>
    %109 = vector.extract_strided_slice %92 {offsets = [0, 0], sizes = [16, 16], strides = [1, 1]} : vector<16x256xf32> to vector<16x16xf32>
    %110 = vector.extract_strided_slice %92 {offsets = [0, 16], sizes = [16, 2], strides = [1, 1]} : vector<16x256xf32> to vector<16x2xf32>
    %c48 = arith.constant 48 : index
    %c0_32 = arith.constant 0 : index
    %111 = vector.load %arg3[%c48, %c0_32] : memref<88x256xf32, #tpu.memory_space<vmem>>, vector<2x16xf32>
    "tpu.trace_start"() <{level = 10 : i32, message = "hf,uf->hu"}> : () -> ()
    %cst_33 = arith.constant dense<0.000000e+00> : vector<2x16xf32>
    %112 = tpu.matmul %111, %90, %cst_33 {dimension_numbers = #tpu.dot_dimension_numbers<[1], [1], [0], [0], [0, 0, 1, 0], [], []>} : vector<2x16xf32>, vector<16x16xf32>, vector<2x16xf32> -> vector<2x16xf32>
    "tpu.trace_stop"() : () -> ()
    %c56 = arith.constant 56 : index
    %c0_34 = arith.constant 0 : index
    %113 = vector.load %arg3[%c56, %c0_34] : memref<88x256xf32, #tpu.memory_space<vmem>>, vector<2x16xf32>
    %114 = vector.extract_strided_slice %110 {offsets = [0, 0], sizes = [16, 1], strides = [1, 1]} : vector<16x2xf32> to vector<16x1xf32>
    %115 = vector.extract_strided_slice %112 {offsets = [0, 0], sizes = [1, 16], strides = [1, 1]} : vector<2x16xf32> to vector<1x16xf32>
    %116 = vector.broadcast %114 : vector<16x1xf32> to vector<16x16xf32>
    %117 = vector.broadcast %115 : vector<1x16xf32> to vector<16x16xf32>
    %118 = arith.addf %116, %117 : vector<16x16xf32>
    %cst_35 = arith.constant 0.000000e+00 : f32
    %119 = vector.broadcast %cst_35 : f32 to vector<16x16xf32>
    %120 = arith.cmpf ogt, %118, %119 : vector<16x16xf32>
    %cst_36 = arith.constant 2.000000e-01 : f32
    %121 = vector.broadcast %cst_36 : f32 to vector<16x16xf32>
    %122 = arith.mulf %121, %118 : vector<16x16xf32>
    %123 = arith.select %120, %118, %122 : vector<16x16xi1>, vector<16x16xf32>
    %124 = arith.addf %123, %0 : vector<16x16xf32>
    %cst_37 = arith.constant dense<0xFF800000> : vector<16xf32>
    %125 = vector.multi_reduction <maximumf>, %124, %cst_37 [1] : vector<16x16xf32> to vector<16xf32>
    %126 = vector.shape_cast %125 : vector<16xf32> to vector<16x1xf32>
    %127 = vector.broadcast %126 : vector<16x1xf32> to vector<16x16xf32>
    %128 = arith.subf %124, %127 : vector<16x16xf32>
    %129 = math.exp %128 : vector<16x16xf32>
    %cst_38 = arith.constant dense<0.000000e+00> : vector<16xf32>
    %130 = vector.multi_reduction <add>, %129, %cst_38 [1] : vector<16x16xf32> to vector<16xf32>
    %131 = vector.shape_cast %130 : vector<16xf32> to vector<16x1xf32>
    %132 = vector.broadcast %131 : vector<16x1xf32> to vector<16x16xf32>
    %133 = arith.divf %129, %132 : vector<16x16xf32>
    %134 = vector.extract_strided_slice %113 {offsets = [0, 0], sizes = [1, 16], strides = [1, 1]} : vector<2x16xf32> to vector<1x16xf32>
    %135 = vector.broadcast %134 : vector<1x16xf32> to vector<16x16xf32>
    %136 = arith.mulf %109, %135 : vector<16x16xf32>
    %cst_39 = arith.constant dense<0.000000e+00> : vector<16x16xf32>
    %137 = tpu.matmul %133, %136, %cst_39 {dimension_numbers = #tpu.dot_dimension_numbers<[1], [0], [0], [1], [0, 0, 1, 1], [], []>} : vector<16x16xf32>, vector<16x16xf32>, vector<16x16xf32> -> vector<16x16xf32>
    %138 = vector.extract_strided_slice %110 {offsets = [0, 1], sizes = [16, 1], strides = [1, 1]} : vector<16x2xf32> to vector<16x1xf32>
    %139 = vector.extract_strided_slice %112 {offsets = [1, 0], sizes = [1, 16], strides = [1, 1]} : vector<2x16xf32> to vector<1x16xf32>
    %140 = vector.broadcast %138 : vector<16x1xf32> to vector<16x16xf32>
    %141 = vector.broadcast %139 : vector<1x16xf32> to vector<16x16xf32>
    %142 = arith.addf %140, %141 : vector<16x16xf32>
    %cst_40 = arith.constant 0.000000e+00 : f32
    %143 = vector.broadcast %cst_40 : f32 to vector<16x16xf32>
    %144 = arith.cmpf ogt, %142, %143 : vector<16x16xf32>
    %cst_41 = arith.constant 2.000000e-01 : f32
    %145 = vector.broadcast %cst_41 : f32 to vector<16x16xf32>
    %146 = arith.mulf %145, %142 : vector<16x16xf32>
    %147 = arith.select %144, %142, %146 : vector<16x16xi1>, vector<16x16xf32>
    %148 = arith.addf %147, %0 : vector<16x16xf32>
    %cst_42 = arith.constant dense<0xFF800000> : vector<16xf32>
    %149 = vector.multi_reduction <maximumf>, %148, %cst_42 [1] : vector<16x16xf32> to vector<16xf32>
    %150 = vector.shape_cast %149 : vector<16xf32> to vector<16x1xf32>
    %151 = vector.broadcast %150 : vector<16x1xf32> to vector<16x16xf32>
    %152 = arith.subf %148, %151 : vector<16x16xf32>
    %153 = math.exp %152 : vector<16x16xf32>
    %cst_43 = arith.constant dense<0.000000e+00> : vector<16xf32>
    %154 = vector.multi_reduction <add>, %153, %cst_43 [1] : vector<16x16xf32> to vector<16xf32>
    %155 = vector.shape_cast %154 : vector<16xf32> to vector<16x1xf32>
    %156 = vector.broadcast %155 : vector<16x1xf32> to vector<16x16xf32>
    %157 = arith.divf %153, %156 : vector<16x16xf32>
    %158 = vector.extract_strided_slice %113 {offsets = [1, 0], sizes = [1, 16], strides = [1, 1]} : vector<2x16xf32> to vector<1x16xf32>
    %159 = vector.broadcast %158 : vector<1x16xf32> to vector<16x16xf32>
    %160 = arith.mulf %109, %159 : vector<16x16xf32>
    %cst_44 = arith.constant dense<0.000000e+00> : vector<16x16xf32>
    %161 = tpu.matmul %157, %160, %cst_44 {dimension_numbers = #tpu.dot_dimension_numbers<[1], [0], [0], [1], [0, 0, 1, 1], [], []>} : vector<16x16xf32>, vector<16x16xf32>, vector<16x16xf32> -> vector<16x16xf32>
    %162 = arith.addf %137, %161 : vector<16x16xf32>
    %163 = vector.broadcast %6 : vector<16x1xf32> to vector<16x16xf32>
    %164 = arith.mulf %162, %163 : vector<16x16xf32>
    %cst_45 = arith.constant 0.000000e+00 : f32
    %165 = vector.broadcast %cst_45 : f32 to vector<16x16xf32>
    %166 = arith.cmpf ogt, %164, %165 : vector<16x16xf32>
    %cst_46 = arith.constant 0.000000e+00 : f32
    %167 = vector.broadcast %cst_46 : f32 to vector<16x16xf32>
    %168 = arith.minimumf %164, %167 : vector<16x16xf32>
    %169 = math.exp %168 : vector<16x16xf32>
    %cst_47 = arith.constant 1.000000e+00 : f32
    %170 = vector.broadcast %cst_47 : f32 to vector<16x16xf32>
    %171 = arith.subf %169, %170 : vector<16x16xf32>
    %172 = arith.select %166, %164, %171 : vector<16x16xi1>, vector<16x16xf32>
    %c64 = arith.constant 64 : index
    %c0_48 = arith.constant 0 : index
    %173 = vector.load %arg3[%c64, %c0_48] : memref<88x256xf32, #tpu.memory_space<vmem>>, vector<16x256xf32>
    %cst_49 = arith.constant dense<0.000000e+00> : vector<16x256xf32>
    %174 = tpu.matmul %172, %173, %cst_49 {dimension_numbers = #tpu.dot_dimension_numbers<[1], [0], [0], [1], [0, 0, 1, 1], [], []>} : vector<16x16xf32>, vector<16x256xf32>, vector<16x256xf32> -> vector<16x256xf32>
    %175 = vector.extract_strided_slice %174 {offsets = [0, 0], sizes = [16, 1], strides = [1, 1]} : vector<16x256xf32> to vector<16x1xf32>
    %cst_50 = arith.constant dense<0xFF800000> : vector<1xf32>
    %176 = vector.multi_reduction <maximumf>, %175, %cst_50 [0] : vector<16x1xf32> to vector<1xf32>
    %177 = vector.shape_cast %176 : vector<1xf32> to vector<1x1xf32>
    %178 = vector.broadcast %177 : vector<1x1xf32> to vector<16x1xf32>
    %179 = arith.subf %175, %178 : vector<16x1xf32>
    %180 = math.exp %179 : vector<16x1xf32>
    %cst_51 = arith.constant dense<0.000000e+00> : vector<1xf32>
    %181 = vector.multi_reduction <add>, %180, %cst_51 [0] : vector<16x1xf32> to vector<1xf32>
    %182 = vector.shape_cast %181 : vector<1xf32> to vector<1x1xf32>
    %183 = vector.broadcast %182 : vector<1x1xf32> to vector<16x1xf32>
    %184 = arith.divf %180, %183 : vector<16x1xf32>
    %185 = vector.extract_strided_slice %174 {offsets = [0, 128], sizes = [16, 128], strides = [1, 1]} : vector<16x256xf32> to vector<16x128xf32>
    %186 = vector.broadcast %184 : vector<16x1xf32> to vector<16x128xf32>
    %187 = arith.mulf %186, %185 : vector<16x128xf32>
    %cst_52 = arith.constant dense<0.000000e+00> : vector<128xf32>
    %188 = vector.multi_reduction <add>, %187, %cst_52 [0] : vector<16x128xf32> to vector<128xf32>
    %189 = vector.shape_cast %188 : vector<128xf32> to vector<1x128xf32>
    %190 = arith.addf %108, %189 : vector<1x128xf32>
    %c80 = arith.constant 80 : index
    %c0_53 = arith.constant 0 : index
    %191 = vector.load %arg3[%c80, %c0_53] : memref<88x256xf32, #tpu.memory_space<vmem>>, vector<1x128xf32>
    %192 = arith.addf %190, %191 : vector<1x128xf32>
    %cst_54 = arith.constant 0.333333343 : f32
    %193 = vector.broadcast %cst_54 : f32 to vector<1x128xf32>
    %194 = arith.mulf %192, %193 : vector<1x128xf32>
    %c0_55 = arith.constant 0 : index
    %c0_56 = arith.constant 0 : index
    %195 = vector.load %arg4[%c0_55, %c0_56] : memref<1x128xf32, #tpu.memory_space<vmem>>, vector<1x128xf32>
    tpu.vector_store %arg4[%c0_55, %c0_56], %194 {strides = array<i32>} : memref<1x128xf32, #tpu.memory_space<vmem>>, vector<1x128xf32>,
    return
  }
  func.func @transform_0(%arg0: i32) -> (i32, i32) {
    %c0_i32 = arith.constant 0 : i32
    %c0_i32_0 = arith.constant 0 : i32
    %c0_i32_1 = arith.constant 0 : i32
    return %c0_i32, %c0_i32_0 : i32, i32
  }
  func.func @transform_1(%arg0: i32) -> (i32, i32) {
    %c0_i32 = arith.constant 0 : i32
    %c0_i32_0 = arith.constant 0 : i32
    %c0_i32_1 = arith.constant 0 : i32
    return %c0_i32, %c0_i32_0 : i32, i32
  }
  func.func @transform_2(%arg0: i32) -> (i32, i32) {
    %c0_i32 = arith.constant 0 : i32
    %c0_i32_0 = arith.constant 0 : i32
    %c0_i32_1 = arith.constant 0 : i32
    return %c0_i32, %c0_i32_0 : i32, i32
  }
  func.func @transform_3(%arg0: i32) -> (i32, i32) {
    %c0_i32 = arith.constant 0 : i32
    %c0_i32_0 = arith.constant 0 : i32
    %c0_i32_1 = arith.constant 0 : i32
    return %c0_i32, %c0_i32_0 : i32, i32
  }
}

</mosaic_0001>

<llo_original>
// kernel: tpu_custom_call.1
$region0: #{tpu_custom_call.1}
  #allocation0 [shape = 'u32[]', space=smem, size = 0x4, offset = 0x4, fixed_abs, tag = 'smem constant byte address 0x4 - core index']
  #allocation1 [shape = 'u32[72,128]{1,0:T(1,128)}', space=vmem, size = 0x9000, scoped, tag = 'internal scratch']
  %s0 = inlined_call_operand.hbm [shape: f32[16,16], index: 0, kind: input, shape index: {}]
  %s1 = inlined_call_operand.hbm [shape: f32[16,16], index: 1, kind: input, shape index: {}]
  %s2 = inlined_call_operand.hbm [shape: f32[88,256], index: 2, kind: input, shape index: {}]
  %s3 = inlined_call_operand.hbm [shape: f32[1,128], index: 3, kind: output, shape index: {}]
  %s4 = sld [smem:[#allocation0]]
  $region34: #{tpu_custom_call.1} parent=0
    _
  %s6 = ssub.s32 1, %s4
  %s7 = scalar_select 0, %s6, %s4
  $region1: #{tpu_custom_call.1} parent=0
    #allocation2 [shape = 'u8[8192]{0}', space=vmem, size = 0x2000, scoped, tag = 'input window, operand 0, single buffered']
    #allocation3 [shape = 's32[1]{0}', space=sflag, size = 0x4, scoped, tag = 'scoped memory for tpu_custom_call.1']
    #allocation4 [shape = 's32[1]{0}', space=sflag, size = 0x4, scoped, tag = 'scoped memory for tpu_custom_call.1']
    #allocation5 [shape = 'u8[8192]{0}', space=vmem, size = 0x2000, scoped, tag = 'input window, operand 1, single buffered']
    #allocation6 [shape = 's32[1]{0}', space=sflag, size = 0x4, scoped, tag = 'scoped memory for tpu_custom_call.1']
    #allocation7 [shape = 'u8[90112]{0}', space=vmem, size = 0x16000, scoped, tag = 'input window, operand 2, single buffered']
    #allocation8 [shape = 'u8[512]{0}', space=vmem, size = 0x400, scoped, tag = 'output window, operand 0, single buffered']
    %8 = vsyncpa [#allocation3], 0
    %9 = vsyncpa [#allocation6], 0
    %10 = vsyncpa [#allocation4], 0
    // Predicated region
    $region2: #{tpu_custom_call.1} parent=1 // pred_check
      _
    $region3: #{tpu_custom_call.1} parent=1 // pred_check_branch
      %12 = sbr.rel (0) target = $region5
    $region4: #{tpu_custom_call.1} parent=1 // pred_region
      %14 = vsyncadd [#allocation3], 0
      %s15 = sshll.u32 %s0, 4
      %s16 = int_to_ptr.hbm [resolvable:$true] %s15
      %s17 = sshll.u32 [#allocation2], 4
      %s18 = int_to_ptr.vmem [resolvable:$true] %s17
      %23 = dma.hbm_to_vmem [thread:$0]  %s16, 256, %s18, [#allocation3], 128, 128, 8
    $region5: #{tpu_custom_call.1} parent=1 // pred_fallthru
      _
    // Predicated region
    $region6: #{tpu_custom_call.1} parent=1 // pred_check
      _
    $region7: #{tpu_custom_call.1} parent=1 // pred_check_branch
      %25 = sbr.rel (0) target = $region9
    $region8: #{tpu_custom_call.1} parent=1 // pred_region
      %27 = vsyncadd [#allocation6], 0
      %s28 = sshll.u32 %s1, 4
      %s29 = int_to_ptr.hbm [resolvable:$true] %s28
      %s30 = sshll.u32 [#allocation5], 4
      %s31 = int_to_ptr.vmem [resolvable:$true] %s30
      %36 = dma.hbm_to_vmem [thread:$0]  %s29, 256, %s31, [#allocation6], 128, 128, 8
    $region9: #{tpu_custom_call.1} parent=1 // pred_fallthru
      _
    // Predicated region
    $region10: #{tpu_custom_call.1} parent=1 // pred_check
      _
    $region11: #{tpu_custom_call.1} parent=1 // pred_check_branch
      %38 = sbr.rel (0) target = $region13
    $region12: #{tpu_custom_call.1} parent=1 // pred_region
      %40 = vsyncadd [#allocation6], 0
      %s41 = sshll.u32 %s2, 4
      %s42 = int_to_ptr.hbm [resolvable:$true] %s41
      %s43 = sshll.u32 [#allocation7], 4
      %s44 = int_to_ptr.vmem [resolvable:$true] %s43
      %49 = dma.hbm_to_vmem [thread:$0]  %s42, 2816, %s44, [#allocation6], 256, 256, 16
    $region13: #{tpu_custom_call.1} parent=1 // pred_fallthru
      _
    // Predicated region
    $region14: #{tpu_custom_call.1} parent=1 // pred_check
      _
    $region15: #{tpu_custom_call.1} parent=1 // pred_check_branch
      %51 = sbr.rel (0) target = $region17
    $region16: #{tpu_custom_call.1} parent=1 // pred_region
      %53 = dma.done [#allocation3], 256
    $region17: #{tpu_custom_call.1} parent=1 // pred_fallthru
      _
    // Predicated region
    $region18: #{tpu_custom_call.1} parent=1 // pred_check
      _
    $region19: #{tpu_custom_call.1} parent=1 // pred_check_branch
      %55 = sbr.rel (0) target = $region21
    $region20: #{tpu_custom_call.1} parent=1 // pred_region
      %57 = dma.done [#allocation6], 256
    $region21: #{tpu_custom_call.1} parent=1 // pred_fallthru
      _
    // Predicated region
    $region22: #{tpu_custom_call.1} parent=1 // pred_check
      _
    $region23: #{tpu_custom_call.1} parent=1 // pred_check_branch
      %59 = sbr.rel (0) target = $region25
    $region24: #{tpu_custom_call.1} parent=1 // pred_region
      %61 = dma.done [#allocation6], 2816
    $region25: #{tpu_custom_call.1} parent=1 // pred_fallthru
      _
    %v62 = vld [vmem:[#allocation5] sm:$0xff]
    %v63 = vld [vmem:[#allocation5 + $0x8] sm:$0xff]
    %vm64 = vcmask 130048
    %v65 = vsel %vm64, %v62, -inf
    %66 = vmax.xlane.f32.xlu0 %v65
    %v67 = vpop.xlane.xlu0 %66
    %v68 = vsel %vm64, %v63, -inf
    %69 = vmax.xlane.f32.xlu0 %v68
    %v70 = vpop.xlane.xlu0 %69
    %vm71 = vcmp.gt.f32.partialorder %v67, -1e+20
    %vm72 = vcmp.gt.f32.partialorder %v70, -1e+20
    %v73 = vsel %vm71, 1, 0
    %v74 = vsel %vm72, 1, 0
    %v75 = vcvt.s32.f32 %v73
    %v76 = vcvt.s32.f32 %v74
    %v77 = vld [vmem:[#allocation2] sm:$0xff]
    %v78 = vld [vmem:[#allocation2 + $0x8] sm:$0xff]
    %v79 = vld [vmem:[#allocation7] sm:$0xff]
    %v80 = vld [vmem:[#allocation7 + $0x8] sm:$0xff]
    %v81 = vld [vmem:[#allocation7 + $0x10] sm:$0xff]
    %v82 = vld [vmem:[#allocation7 + $0x18] sm:$0xff]
    %v84 = vsel %vm64, %v77, 0
    %v87 = vsel %vm64, %v78, 0
    %89 = vmatpush.msra.mxu0 0.0
    %90 = vmatpush.msra.mxu0 0.0
    %91 = vmatpush.msra.mxu0 0.0
    %92 = vmatpush.msra.mxu0 0.0
    %93 = vmatpush.msra.mxu0 0.0
    %94 = vmatpush.msra.mxu0 0.0
    %95 = vmatpush.msra.mxu0 0.0
    %96 = vmatpush.msra.mxu0 0.0
    %97 = vmatpush.msra.mxu0 0.0
    %98 = vmatpush.msra.mxu0 0.0
    %99 = vmatpush.msra.mxu0 0.0
    %100 = vmatpush.msra.mxu0 0.0
    %101 = vmatpush.msra.mxu0 0.0
    %102 = vmatpush.msra.mxu0 0.0
    %103 = vmatpush.msra.mxu0 %v81
    %104 = vmatpush.msra.mxu0 %v79
    %105 = vmatmul.f32.gmra.mxu0 %v84
    %v106 = vpop.f32.mrf.mxu0
    %v107 = vadd.f32 0.0, %v106
    %108 = vmatmul.f32.gmra.mxu0 %v87
    %v109 = vpop.f32.mrf.mxu0
    %v110 = vadd.f32 0.0, %v109
    %111 = vdwg.mxu0
    %112 = vmatpush.msra.mxu0 0.0
    %113 = vmatpush.msra.mxu0 0.0
    %114 = vmatpush.msra.mxu0 0.0
    %115 = vmatpush.msra.mxu0 0.0
    %116 = vmatpush.msra.mxu0 0.0
    %117 = vmatpush.msra.mxu0 0.0
    %118 = vmatpush.msra.mxu0 0.0
    %119 = vmatpush.msra.mxu0 0.0
    %120 = vmatpush.msra.mxu0 0.0
    %121 = vmatpush.msra.mxu0 0.0
    %122 = vmatpush.msra.mxu0 0.0
    %123 = vmatpush.msra.mxu0 0.0
    %124 = vmatpush.msra.mxu0 0.0
    %125 = vmatpush.msra.mxu0 0.0
    %126 = vmatpush.msra.mxu0 %v82
    %127 = vmatpush.msra.mxu0 %v80
    %128 = vmatmul.f32.gmra.mxu0 %v84
    %v129 = vpop.f32.mrf.mxu0
    %v130 = vadd.f32 0.0, %v129
    %131 = vmatmul.f32.gmra.mxu0 %v87
    %v132 = vpop.f32.mrf.mxu0
    %v133 = vadd.f32 0.0, %v132
    %134 = vdwg.mxu0
    %vm135 = vcmask 154768
    %v136 = vsel %vm135, %v107, -inf
    %v137 = vsel %vm135, %v110, -inf
    %v138 = vmax.f32 %v136, %v137
    %v139 = vrot.slane %v138, 4
    %v140 = vmax.f32 %v138, %v139
    %v141 = vrot.slane %v140, 2
    %v142 = vmax.f32 %v140, %v141
    %v143 = vrot.slane %v142, 1
    %v144 = vmax.f32 %v142, %v143
    %v145 = vsub.f32 %v107, %v144
    %v146 = vsub.f32 %v110, %v144
    %v147 = vmul.f32 %v145, 1.442695
    %v148 = vpow.pop %v147
    %v149 = vmul.f32 %v146, 1.442695
    %v150 = vpow.pop %v149
    %v151 = vsel %vm135, %v148, 0.0
    %v152 = vsel %vm135, %v150, 0.0
    %v153 = vadd.f32 %v151, %v152
    %v154 = vrot.slane %v153, 4
    %v155 = vadd.f32 %v153, %v154
    %v156 = vrot.slane %v155, 2
    %v157 = vadd.f32 %v155, %v156
    %v158 = vrot.slane %v157, 1
    %v159 = vadd.f32 %v157, %v158
    %v160 = vrcp.pop %v159
    %v161 = vmul.f32 %v159, %v160
    %v162 = vsub.f32 1.0, %v161
    %v163 = vmul.f32 %v160, %v162
    %v164 = vadd.f32 %v160, %v163
    %vm165 = vweird.f32 %v159
    %vm166 = vweird.f32 %v160
    %vm167 = vmor %vm165, %vm166
    %v168 = vsel %vm167, %v160, %v164
    %v169 = vand.u32 2147483647, %v159
    %vm170 = vcmp.eq.f32.partialorder %v169, 8.507059e+37
    %v171 = vand.u32 %v159, 2147483648
    %v172 = vor.u32 1.1754944e-38, %v171
    %v173 = vsel %vm170, %v172, %v168
    %v174 = vmul.f32 %v148, %v173
    %v175 = vmul.f32 %v150, %v173
    %177 = vset.pattern.permute.xlu0 18
    %178 = vperm.xlu0 %177, %v174
    %v179 = vpop.permute.xlu0 %178
    %182 = vset.pattern.permute.xlu0 18
    %183 = vperm.xlu0 %182, %v175
    %v184 = vpop.permute.xlu0 %183
    %v186 = vmul.f32 %v179, %v130
    %v187 = vmul.f32 %v184, %v133
    %v188 = vadd.f32 %v186, %v187
    %v189 = vrot.slane %v188, 4
    %v190 = vadd.f32 %v188, %v189
    %v191 = vrot.slane %v190, 2
    %v192 = vadd.f32 %v190, %v191
    %v193 = vrot.slane %v192, 1
    %v194 = vadd.f32 %v192, %v193
    %v195 = vadd.f32 %v194, 0.0
    %v196 = vld [vmem:[#allocation7 + $0x20] sm:$0x3]
    %v198 = vsel %vm64, %v196, 0
    %200 = vmatpush.xpose.msra.mxu0 0.0
    %201 = vmatpush.xpose.msra.mxu0 0.0
    %202 = vmatpush.xpose.msra.mxu0 0.0
    %203 = vmatpush.xpose.msra.mxu0 0.0
    %204 = vmatpush.xpose.msra.mxu0 0.0
    %205 = vmatpush.xpose.msra.mxu0 0.0
    %206 = vmatpush.xpose.msra.mxu0 0.0
    %207 = vmatpush.xpose.msra.mxu0 0.0
    %208 = vmatpush.xpose.msra.mxu0 0.0
    %209 = vmatpush.xpose.msra.mxu0 0.0
    %210 = vmatpush.xpose.msra.mxu0 0.0
    %211 = vmatpush.xpose.msra.mxu0 0.0
    %212 = vmatpush.xpose.msra.mxu0 0.0
    %213 = vmatpush.xpose.msra.mxu0 0.0
    %214 = vmatpush.xpose.msra.mxu0 %v87
    %215 = vmatpush.xpose.msra.mxu0 %v84
    %216 = vmatmul.f32.gmra.mxu0 %v198
    %v217 = vpop.f32.mrf.mxu0
    %v218 = vadd.f32 0.0, %v217
    %219 = vdwg.mxu0
    %v220 = vld [vmem:[#allocation7 + $0x30] sm:$0x3]
    %222 = vset.pattern.permute.xlu0 16
    %223 = vperm.xlu0 %222, %v107
    %v224 = vpop.permute.xlu0 %223
    %227 = vset.pattern.permute.xlu0 16
    %228 = vperm.xlu0 %227, %v110
    %v229 = vpop.permute.xlu0 %228
    %v231 = vperm.slane %v218, 0
    %v232 = vadd.f32 %v224, %v231
    %v233 = vadd.f32 %v229, %v231
    %vm234 = vcmp.gt.f32.partialorder %v232, 0.0
    %vm235 = vcmp.gt.f32.partialorder %v233, 0.0
    %v236 = vmul.f32 %v232, 0.2
    %v237 = vmul.f32 %v233, 0.2
    %v238 = vsel %vm234, %v232, %v236
    %v239 = vsel %vm235, %v233, %v237
    %v240 = vadd.f32 %v238, %v62
    %v241 = vadd.f32 %v239, %v63
    %v242 = vsel %vm64, %v240, -inf
    %243 = vmax.xlane.f32.xlu0 %v242
    %v244 = vpop.xlane.xlu0 %243
    %v245 = vsel %vm64, %v241, -inf
    %246 = vmax.xlane.f32.xlu0 %v245
    %v247 = vpop.xlane.xlu0 %246
    %v248 = vsub.f32 %v240, %v244
    %v249 = vsub.f32 %v241, %v247
    %v250 = vmul.f32 %v248, 1.442695
    %v251 = vpow.pop %v250
    %v252 = vmul.f32 %v249, 1.442695
    %v253 = vpow.pop %v252
    %v254 = vsel %vm64, %v251, 0.0
    %255 = vadd.xlane.f32.xlu0 %v254
    %v256 = vpop.xlane.xlu0 %255
    %v257 = vsel %vm64, %v253, 0.0
    %258 = vadd.xlane.f32.xlu0 %v257
    %v259 = vpop.xlane.xlu0 %258
    %v260 = vrcp.pop %v256
    %v261 = vmul.f32 %v256, %v260
    %v262 = vsub.f32 1.0, %v261
    %v263 = vmul.f32 %v260, %v262
    %v264 = vadd.f32 %v260, %v263
    %vm265 = vweird.f32 %v256
    %vm266 = vweird.f32 %v260
    %vm267 = vmor %vm265, %vm266
    %v268 = vsel %vm267, %v260, %v264
    %v269 = vand.u32 2147483647, %v256
    %vm270 = vcmp.eq.f32.partialorder %v269, 8.507059e+37
    %v271 = vand.u32 %v256, 2147483648
    %v272 = vor.u32 1.1754944e-38, %v271
    %v273 = vsel %vm270, %v272, %v268
    %v274 = vmul.f32 %v251, %v273
    %v275 = vrcp.pop %v259
    %v276 = vmul.f32 %v259, %v275
    %v277 = vsub.f32 1.0, %v276
    %v278 = vmul.f32 %v275, %v277
    %v279 = vadd.f32 %v275, %v278
    %vm280 = vweird.f32 %v259
    %vm281 = vweird.f32 %v275
    %vm282 = vmor %vm280, %vm281
    %v283 = vsel %vm282, %v275, %v279
    %v284 = vand.u32 2147483647, %v259
    %vm285 = vcmp.eq.f32.partialorder %v284, 8.507059e+37
    %v286 = vand.u32 %v259, 2147483648
    %v287 = vor.u32 1.1754944e-38, %v286
    %v288 = vsel %vm285, %v287, %v283
    %v289 = vmul.f32 %v253, %v288
    %v290 = vperm.slane %v220, 0
    %v291 = vmul.f32 %v107, %v290
    %v292 = vmul.f32 %v110, %v290
    %293 = vset.pattern.permute.xlu0 17
    %294 = vperm.xlu0 %293, %v107
    %v295 = vpop.permute.xlu0 %294
    %297 = vset.pattern.permute.xlu0 17
    %298 = vperm.xlu0 %297, %v110
    %v299 = vpop.permute.xlu0 %298
    %v301 = vperm.slane %v218, 1
    %v302 = vadd.f32 %v295, %v301
    %v303 = vadd.f32 %v299, %v301
    %vm304 = vcmp.gt.f32.partialorder %v302, 0.0
    %vm305 = vcmp.gt.f32.partialorder %v303, 0.0
    %v306 = vmul.f32 %v302, 0.2
    %v307 = vmul.f32 %v303, 0.2
    %v308 = vsel %vm304, %v302, %v306
    %v309 = vsel %vm305, %v303, %v307
    %v310 = vadd.f32 %v308, %v62
    %v311 = vadd.f32 %v309, %v63
    %v312 = vsel %vm64, %v310, -inf
    %313 = vmax.xlane.f32.xlu0 %v312
    %v314 = vpop.xlane.xlu0 %313
    %v315 = vsel %vm64, %v311, -inf
    %316 = vmax.xlane.f32.xlu0 %v315
    %v317 = vpop.xlane.xlu0 %316
    %v318 = vsub.f32 %v310, %v314
    %v319 = vsub.f32 %v311, %v317
    %v320 = vmul.f32 %v318, 1.442695
    %v321 = vpow.pop %v320
    %v322 = vmul.f32 %v319, 1.442695
    %v323 = vpow.pop %v322
    %v324 = vsel %vm64, %v321, 0.0
    %325 = vadd.xlane.f32.xlu0 %v324
    %v326 = vpop.xlane.xlu0 %325
    %v327 = vsel %vm64, %v323, 0.0
    %328 = vadd.xlane.f32.xlu0 %v327
    %v329 = vpop.xlane.xlu0 %328
    %v330 = vrcp.pop %v326
    %v331 = vmul.f32 %v326, %v330
    %v332 = vsub.f32 1.0, %v331
    %v333 = vmul.f32 %v330, %v332
    %v334 = vadd.f32 %v330, %v333
    %vm335 = vweird.f32 %v326
    %vm336 = vweird.f32 %v330
    %vm337 = vmor %vm335, %vm336
    %v338 = vsel %vm337, %v330, %v334
    %v339 = vand.u32 2147483647, %v326
    %vm340 = vcmp.eq.f32.partialorder %v339, 8.507059e+37
    %v341 = vand.u32 %v326, 2147483648
    %v342 = vor.u32 1.1754944e-38, %v341
    %v343 = vsel %vm340, %v342, %v338
    %v344 = vmul.f32 %v321, %v343
    %v345 = vrcp.pop %v329
    %v346 = vmul.f32 %v329, %v345
    %v347 = vsub.f32 1.0, %v346
    %v348 = vmul.f32 %v345, %v347
    %v349 = vadd.f32 %v345, %v348
    %vm350 = vweird.f32 %v329
    %vm351 = vweird.f32 %v345
    %vm352 = vmor %vm350, %vm351
    %v353 = vsel %vm352, %v345, %v349
    %v354 = vand.u32 2147483647, %v329
    %vm355 = vcmp.eq.f32.partialorder %v354, 8.507059e+37
    %v356 = vand.u32 %v329, 2147483648
    %v357 = vor.u32 1.1754944e-38, %v356
    %v358 = vsel %vm355, %v357, %v353
    %v359 = vmul.f32 %v323, %v358
    %v360 = vperm.slane %v220, 1
    %v361 = vmul.f32 %v107, %v360
    %v362 = vmul.f32 %v110, %v360
    %v364 = vsel %vm64, %v344, 0
    %v367 = vsel %vm64, %v359, 0
    %369 = vmatpush.msra.mxu0 0.0
    %370 = vmatpush.msra.mxu0 0.0
    %371 = vmatpush.msra.mxu0 0.0
    %372 = vmatpush.msra.mxu0 0.0
    %373 = vmatpush.msra.mxu0 0.0
    %374 = vmatpush.msra.mxu0 0.0
    %375 = vmatpush.msra.mxu0 0.0
    %376 = vmatpush.msra.mxu0 0.0
    %377 = vmatpush.msra.mxu0 0.0
    %378 = vmatpush.msra.mxu0 0.0
    %379 = vmatpush.msra.mxu0 0.0
    %380 = vmatpush.msra.mxu0 0.0
    %381 = vmatpush.msra.mxu0 0.0
    %382 = vmatpush.msra.mxu0 0.0
    %383 = vmatpush.msra.mxu0 %v362
    %384 = vmatpush.msra.mxu0 %v361
    %385 = vmatmul.f32.gmra.mxu0 %v364
    %v386 = vpop.f32.mrf.mxu0
    %v387 = vadd.f32 0.0, %v386
    %388 = vmatmul.f32.gmra.mxu0 %v367
    %v389 = vpop.f32.mrf.mxu0
    %v390 = vadd.f32 0.0, %v389
    %391 = vdwg.mxu0
    %v393 = vsel %vm64, %v274, 0
    %v396 = vsel %vm64, %v289, 0
    %398 = vmatpush.msra.mxu0 0.0
    %399 = vmatpush.msra.mxu0 0.0
    %400 = vmatpush.msra.mxu0 0.0
    %401 = vmatpush.msra.mxu0 0.0
    %402 = vmatpush.msra.mxu0 0.0
    %403 = vmatpush.msra.mxu0 0.0
    %404 = vmatpush.msra.mxu0 0.0
    %405 = vmatpush.msra.mxu0 0.0
    %406 = vmatpush.msra.mxu0 0.0
    %407 = vmatpush.msra.mxu0 0.0
    %408 = vmatpush.msra.mxu0 0.0
    %409 = vmatpush.msra.mxu0 0.0
    %410 = vmatpush.msra.mxu0 0.0
    %411 = vmatpush.msra.mxu0 0.0
    %412 = vmatpush.msra.mxu0 %v292
    %413 = vmatpush.msra.mxu0 %v291
    %414 = vmatmul.f32.gmra.mxu0 %v393
    %v415 = vpop.f32.mrf.mxu0
    %v416 = vadd.f32 %v387, %v415
    %417 = vmatmul.f32.gmra.mxu0 %v396
    %v418 = vpop.f32.mrf.mxu0
    %v419 = vadd.f32 %v390, %v418
    %420 = vdwg.mxu0
    %v421 = vmul.f32 %v416, %v75
    %v422 = vmul.f32 %v419, %v76
    %vm423 = vcmp.gt.f32.partialorder %v421, 0.0
    %vm424 = vcmp.gt.f32.partialorder %v422, 0.0
    %v425 = vmin.f32 %v421, 0.0
    %v426 = vmin.f32 %v422, 0.0
    %v427 = vmul.f32 %v425, 1.442695
    %v428 = vpow.pop %v427
    %v429 = vmul.f32 %v426, 1.442695
    %v430 = vpow.pop %v429
    %v431 = vsub.f32 %v428, 1.0
    %v432 = vsub.f32 %v430, 1.0
    %v433 = vsel %vm423, %v421, %v431
    %v434 = vsel %vm424, %v422, %v432
    %v435 = vld [vmem:[#allocation7 + $0x40] sm:$0xff]
    %v436 = vld [vmem:[#allocation7 + $0x48] sm:$0xff]
    %v437 = vld [vmem:[#allocation7 + $0x50] sm:$0xff]
    %v438 = vld [vmem:[#allocation7 + $0x58] sm:$0xff]
    %v440 = vsel %vm64, %v433, 0
    %v443 = vsel %vm64, %v434, 0
    %445 = vmatpush.msra.mxu0 0.0
    %446 = vmatpush.msra.mxu0 0.0
    %447 = vmatpush.msra.mxu0 0.0
    %448 = vmatpush.msra.mxu0 0.0
    %449 = vmatpush.msra.mxu0 0.0
    %450 = vmatpush.msra.mxu0 0.0
    %451 = vmatpush.msra.mxu0 0.0
    %452 = vmatpush.msra.mxu0 0.0
    %453 = vmatpush.msra.mxu0 0.0
    %454 = vmatpush.msra.mxu0 0.0
    %455 = vmatpush.msra.mxu0 0.0
    %456 = vmatpush.msra.mxu0 0.0
    %457 = vmatpush.msra.mxu0 0.0
    %458 = vmatpush.msra.mxu0 0.0
    %459 = vmatpush.msra.mxu0 %v437
    %460 = vmatpush.msra.mxu0 %v435
    %461 = vmatmul.f32.gmra.mxu0 %v440
    %v462 = vpop.f32.mrf.mxu0
    %v463 = vadd.f32 0.0, %v462
    %464 = vmatmul.f32.gmra.mxu0 %v443
    %v465 = vpop.f32.mrf.mxu0
    %v466 = vadd.f32 0.0, %v465
    %467 = vdwg.mxu0
    %468 = vmatpush.msra.mxu0 0.0
    %469 = vmatpush.msra.mxu0 0.0
    %470 = vmatpush.msra.mxu0 0.0
    %471 = vmatpush.msra.mxu0 0.0
    %472 = vmatpush.msra.mxu0 0.0
    %473 = vmatpush.msra.mxu0 0.0
    %474 = vmatpush.msra.mxu0 0.0
    %475 = vmatpush.msra.mxu0 0.0
    %476 = vmatpush.msra.mxu0 0.0
    %477 = vmatpush.msra.mxu0 0.0
    %478 = vmatpush.msra.mxu0 0.0
    %479 = vmatpush.msra.mxu0 0.0
    %480 = vmatpush.msra.mxu0 0.0
    %481 = vmatpush.msra.mxu0 0.0
    %482 = vmatpush.msra.mxu0 %v438
    %483 = vmatpush.msra.mxu0 %v436
    %484 = vmatmul.f32.gmra.mxu0 %v440
    %v485 = vpop.f32.mrf.mxu0
    %v486 = vadd.f32 0.0, %v485
    %487 = vmatmul.f32.gmra.mxu0 %v443
    %v488 = vpop.f32.mrf.mxu0
    %v489 = vadd.f32 0.0, %v488
    %490 = vdwg.mxu0
    %v491 = vsel %vm135, %v463, -inf
    %v492 = vsel %vm135, %v466, -inf
    %v493 = vmax.f32 %v491, %v492
    %v494 = vrot.slane %v493, 4
    %v495 = vmax.f32 %v493, %v494
    %v496 = vrot.slane %v495, 2
    %v497 = vmax.f32 %v495, %v496
    %v498 = vrot.slane %v497, 1
    %v499 = vmax.f32 %v497, %v498
    %v500 = vsub.f32 %v463, %v499
    %v501 = vsub.f32 %v466, %v499
    %v502 = vmul.f32 %v500, 1.442695
    %v503 = vpow.pop %v502
    %v504 = vmul.f32 %v501, 1.442695
    %v505 = vpow.pop %v504
    %v506 = vsel %vm135, %v503, 0.0
    %v507 = vsel %vm135, %v505, 0.0
    %v508 = vadd.f32 %v506, %v507
    %v509 = vrot.slane %v508, 4
    %v510 = vadd.f32 %v508, %v509
    %v511 = vrot.slane %v510, 2
    %v512 = vadd.f32 %v510, %v511
    %v513 = vrot.slane %v512, 1
    %v514 = vadd.f32 %v512, %v513
    %v515 = vrcp.pop %v514
    %v516 = vmul.f32 %v514, %v515
    %v517 = vsub.f32 1.0, %v516
    %v518 = vmul.f32 %v515, %v517
    %v519 = vadd.f32 %v515, %v518
    %vm520 = vweird.f32 %v514
    %vm521 = vweird.f32 %v515
    %vm522 = vmor %vm520, %vm521
    %v523 = vsel %vm522, %v515, %v519
    %v524 = vand.u32 2147483647, %v514
    %vm525 = vcmp.eq.f32.partialorder %v524, 8.507059e+37
    %v526 = vand.u32 %v514, 2147483648
    %v527 = vor.u32 1.1754944e-38, %v526
    %v528 = vsel %vm525, %v527, %v523
    %v529 = vmul.f32 %v503, %v528
    %v530 = vmul.f32 %v505, %v528
    %532 = vset.pattern.permute.xlu0 18
    %533 = vperm.xlu0 %532, %v529
    %v534 = vpop.permute.xlu0 %533
    %537 = vset.pattern.permute.xlu0 18
    %538 = vperm.xlu0 %537, %v530
    %v539 = vpop.permute.xlu0 %538
    %v541 = vmul.f32 %v534, %v486
    %v542 = vmul.f32 %v539, %v489
    %v543 = vadd.f32 %v541, %v542
    %v544 = vrot.slane %v543, 4
    %v545 = vadd.f32 %v543, %v544
    %v546 = vrot.slane %v545, 2
    %v547 = vadd.f32 %v545, %v546
    %v548 = vrot.slane %v547, 1
    %v549 = vadd.f32 %v547, %v548
    %v550 = vadd.f32 %v195, %v549
    %v551 = vld [vmem:[#allocation7 + $0x60] sm:$0x3]
    %v553 = vsel %vm64, %v551, 0
    %555 = vmatpush.xpose.msra.mxu0 0.0
    %556 = vmatpush.xpose.msra.mxu0 0.0
    %557 = vmatpush.xpose.msra.mxu0 0.0
    %558 = vmatpush.xpose.msra.mxu0 0.0
    %559 = vmatpush.xpose.msra.mxu0 0.0
    %560 = vmatpush.xpose.msra.mxu0 0.0
    %561 = vmatpush.xpose.msra.mxu0 0.0
    %562 = vmatpush.xpose.msra.mxu0 0.0
    %563 = vmatpush.xpose.msra.mxu0 0.0
    %564 = vmatpush.xpose.msra.mxu0 0.0
    %565 = vmatpush.xpose.msra.mxu0 0.0
    %566 = vmatpush.xpose.msra.mxu0 0.0
    %567 = vmatpush.xpose.msra.mxu0 0.0
    %568 = vmatpush.xpose.msra.mxu0 0.0
    %569 = vmatpush.xpose.msra.mxu0 %v443
    %570 = vmatpush.xpose.msra.mxu0 %v440
    %571 = vmatmul.f32.gmra.mxu0 %v553
    %v572 = vpop.f32.mrf.mxu0
    %v573 = vadd.f32 0.0, %v572
    %574 = vdwg.mxu0
    %v575 = vld [vmem:[#allocation7 + $0x70] sm:$0x3]
    %577 = vset.pattern.permute.xlu0 16
    %578 = vperm.xlu0 %577, %v463
    %v579 = vpop.permute.xlu0 %578
    %582 = vset.pattern.permute.xlu0 16
    %583 = vperm.xlu0 %582, %v466
    %v584 = vpop.permute.xlu0 %583
    %v586 = vperm.slane %v573, 0
    %v587 = vadd.f32 %v579, %v586
    %v588 = vadd.f32 %v584, %v586
    %vm589 = vcmp.gt.f32.partialorder %v587, 0.0
    %vm590 = vcmp.gt.f32.partialorder %v588, 0.0
    %v591 = vmul.f32 %v587, 0.2
    %v592 = vmul.f32 %v588, 0.2
    %v593 = vsel %vm589, %v587, %v591
    %v594 = vsel %vm590, %v588, %v592
    %v595 = vadd.f32 %v593, %v62
    %v596 = vadd.f32 %v594, %v63
    %v597 = vsel %vm64, %v595, -inf
    %598 = vmax.xlane.f32.xlu0 %v597
    %v599 = vpop.xlane.xlu0 %598
    %v600 = vsel %vm64, %v596, -inf
    %601 = vmax.xlane.f32.xlu0 %v600
    %v602 = vpop.xlane.xlu0 %601
    %v603 = vsub.f32 %v595, %v599
    %v604 = vsub.f32 %v596, %v602
    %v605 = vmul.f32 %v603, 1.442695
    %v606 = vpow.pop %v605
    %v607 = vmul.f32 %v604, 1.442695
    %v608 = vpow.pop %v607
    %v609 = vsel %vm64, %v606, 0.0
    %610 = vadd.xlane.f32.xlu0 %v609
    %v611 = vpop.xlane.xlu0 %610
    %v612 = vsel %vm64, %v608, 0.0
    %613 = vadd.xlane.f32.xlu0 %v612
    %v614 = vpop.xlane.xlu0 %613
    %v615 = vrcp.pop %v611
    %v616 = vmul.f32 %v611, %v615
    %v617 = vsub.f32 1.0, %v616
    %v618 = vmul.f32 %v615, %v617
    %v619 = vadd.f32 %v615, %v618
    %vm620 = vweird.f32 %v611
    %vm621 = vweird.f32 %v615
    %vm622 = vmor %vm620, %vm621
    %v623 = vsel %vm622, %v615, %v619
    %v624 = vand.u32 2147483647, %v611
    %vm625 = vcmp.eq.f32.partialorder %v624, 8.507059e+37
    %v626 = vand.u32 %v611, 2147483648
    %v627 = vor.u32 1.1754944e-38, %v626
    %v628 = vsel %vm625, %v627, %v623
    %v629 = vmul.f32 %v606, %v628
    %v630 = vrcp.pop %v614
    %v631 = vmul.f32 %v614, %v630
    %v632 = vsub.f32 1.0, %v631
    %v633 = vmul.f32 %v630, %v632
    %v634 = vadd.f32 %v630, %v633
    %vm635 = vweird.f32 %v614
    %vm636 = vweird.f32 %v630
    %vm637 = vmor %vm635, %vm636
    %v638 = vsel %vm637, %v630, %v634
    %v639 = vand.u32 2147483647, %v614
    %vm640 = vcmp.eq.f32.partialorder %v639, 8.507059e+37
    %v641 = vand.u32 %v614, 2147483648
    %v642 = vor.u32 1.1754944e-38, %v641
    %v643 = vsel %vm640, %v642, %v638
    %v644 = vmul.f32 %v608, %v643
    %v645 = vperm.slane %v575, 0
    %v646 = vmul.f32 %v463, %v645
    %v647 = vmul.f32 %v466, %v645
    %648 = vset.pattern.permute.xlu0 17
    %649 = vperm.xlu0 %648, %v463
    %v650 = vpop.permute.xlu0 %649
    %652 = vset.pattern.permute.xlu0 17
    %653 = vperm.xlu0 %652, %v466
    %v654 = vpop.permute.xlu0 %653
    %v656 = vperm.slane %v573, 1
    %v657 = vadd.f32 %v650, %v656
    %v658 = vadd.f32 %v654, %v656
    %vm659 = vcmp.gt.f32.partialorder %v657, 0.0
    %vm660 = vcmp.gt.f32.partialorder %v658, 0.0
    %v661 = vmul.f32 %v657, 0.2
    %v662 = vmul.f32 %v658, 0.2
    %v663 = vsel %vm659, %v657, %v661
    %v664 = vsel %vm660, %v658, %v662
    %v665 = vadd.f32 %v663, %v62
    %v666 = vadd.f32 %v664, %v63
    %v667 = vsel %vm64, %v665, -inf
    %668 = vmax.xlane.f32.xlu0 %v667
    %v669 = vpop.xlane.xlu0 %668
    %v670 = vsel %vm64, %v666, -inf
    %671 = vmax.xlane.f32.xlu0 %v670
    %v672 = vpop.xlane.xlu0 %671
    %v673 = vsub.f32 %v665, %v669
    %v674 = vsub.f32 %v666, %v672
    %v675 = vmul.f32 %v673, 1.442695
    %v676 = vpow.pop %v675
    %v677 = vmul.f32 %v674, 1.442695
    %v678 = vpow.pop %v677
    %v679 = vsel %vm64, %v676, 0.0
    %680 = vadd.xlane.f32.xlu0 %v679
    %v681 = vpop.xlane.xlu0 %680
    %v682 = vsel %vm64, %v678, 0.0
    %683 = vadd.xlane.f32.xlu0 %v682
    %v684 = vpop.xlane.xlu0 %683
    %v685 = vrcp.pop %v681
    %v686 = vmul.f32 %v681, %v685
    %v687 = vsub.f32 1.0, %v686
    %v688 = vmul.f32 %v685, %v687
    %v689 = vadd.f32 %v685, %v688
    %vm690 = vweird.f32 %v681
    %vm691 = vweird.f32 %v685
    %vm692 = vmor %vm690, %vm691
    %v693 = vsel %vm692, %v685, %v689
    %v694 = vand.u32 2147483647, %v681
    %vm695 = vcmp.eq.f32.partialorder %v694, 8.507059e+37
    %v696 = vand.u32 %v681, 2147483648
    %v697 = vor.u32 1.1754944e-38, %v696
    %v698 = vsel %vm695, %v697, %v693
    %v699 = vmul.f32 %v676, %v698
    %v700 = vrcp.pop %v684
    %v701 = vmul.f32 %v684, %v700
    %v702 = vsub.f32 1.0, %v701
    %v703 = vmul.f32 %v700, %v702
    %v704 = vadd.f32 %v700, %v703
    %vm705 = vweird.f32 %v684
    %vm706 = vweird.f32 %v700
    %vm707 = vmor %vm705, %vm706
    %v708 = vsel %vm707, %v700, %v704
    %v709 = vand.u32 2147483647, %v684
    %vm710 = vcmp.eq.f32.partialorder %v709, 8.507059e+37
    %v711 = vand.u32 %v684, 2147483648
    %v712 = vor.u32 1.1754944e-38, %v711
    %v713 = vsel %vm710, %v712, %v708
    %v714 = vmul.f32 %v678, %v713
    %v715 = vperm.slane %v575, 1
    %v716 = vmul.f32 %v463, %v715
    %v717 = vmul.f32 %v466, %v715
    %v719 = vsel %vm64, %v699, 0
    %v722 = vsel %vm64, %v714, 0
    %724 = vmatpush.msra.mxu0 0.0
    %725 = vmatpush.msra.mxu0 0.0
    %726 = vmatpush.msra.mxu0 0.0
    %727 = vmatpush.msra.mxu0 0.0
    %728 = vmatpush.msra.mxu0 0.0
    %729 = vmatpush.msra.mxu0 0.0
    %730 = vmatpush.msra.mxu0 0.0
    %731 = vmatpush.msra.mxu0 0.0
    %732 = vmatpush.msra.mxu0 0.0
    %733 = vmatpush.msra.mxu0 0.0
    %734 = vmatpush.msra.mxu0 0.0
    %735 = vmatpush.msra.mxu0 0.0
    %736 = vmatpush.msra.mxu0 0.0
    %737 = vmatpush.msra.mxu0 0.0
    %738 = vmatpush.msra.mxu0 %v717
    %739 = vmatpush.msra.mxu0 %v716
    %740 = vmatmul.f32.gmra.mxu0 %v719
    %v741 = vpop.f32.mrf.mxu0
    %v742 = vadd.f32 0.0, %v741
    %743 = vmatmul.f32.gmra.mxu0 %v722
    %v744 = vpop.f32.mrf.mxu0
    %v745 = vadd.f32 0.0, %v744
    %746 = vdwg.mxu0
    %v748 = vsel %vm64, %v629, 0
    %v751 = vsel %vm64, %v644, 0
    %753 = vmatpush.msra.mxu0 0.0
    %754 = vmatpush.msra.mxu0 0.0
    %755 = vmatpush.msra.mxu0 0.0
    %756 = vmatpush.msra.mxu0 0.0
    %757 = vmatpush.msra.mxu0 0.0
    %758 = vmatpush.msra.mxu0 0.0
    %759 = vmatpush.msra.mxu0 0.0
    %760 = vmatpush.msra.mxu0 0.0
    %761 = vmatpush.msra.mxu0 0.0
    %762 = vmatpush.msra.mxu0 0.0
    %763 = vmatpush.msra.mxu0 0.0
    %764 = vmatpush.msra.mxu0 0.0
    %765 = vmatpush.msra.mxu0 0.0
    %766 = vmatpush.msra.mxu0 0.0
    %767 = vmatpush.msra.mxu0 %v647
    %768 = vmatpush.msra.mxu0 %v646
    %769 = vmatmul.f32.gmra.mxu0 %v748
    %v770 = vpop.f32.mrf.mxu0
    %v771 = vadd.f32 %v742, %v770
    %772 = vmatmul.f32.gmra.mxu0 %v751
    %v773 = vpop.f32.mrf.mxu0
    %v774 = vadd.f32 %v745, %v773
    %775 = vdwg.mxu0
    %v776 = vmul.f32 %v771, %v75
    %v777 = vmul.f32 %v774, %v76
    %vm778 = vcmp.gt.f32.partialorder %v776, 0.0
    %vm779 = vcmp.gt.f32.partialorder %v777, 0.0
    %v780 = vmin.f32 %v776, 0.0
    %v781 = vmin.f32 %v777, 0.0
    %v782 = vmul.f32 %v780, 1.442695
    %v783 = vpow.pop %v782
    %v784 = vmul.f32 %v781, 1.442695
    %v785 = vpow.pop %v784
    %v786 = vsub.f32 %v783, 1.0
    %v787 = vsub.f32 %v785, 1.0
    %v788 = vsel %vm778, %v776, %v786
    %v789 = vsel %vm779, %v777, %v787
    %v790 = vld [vmem:[#allocation7 + $0x80] sm:$0xff]
    %v791 = vld [vmem:[#allocation7 + $0x88] sm:$0xff]
    %v792 = vld [vmem:[#allocation7 + $0x90] sm:$0xff]
    %v793 = vld [vmem:[#allocation7 + $0x98] sm:$0xff]
    %v795 = vsel %vm64, %v788, 0
    %v798 = vsel %vm64, %v789, 0
    %800 = vmatpush.msra.mxu0 0.0
    %801 = vmatpush.msra.mxu0 0.0
    %802 = vmatpush.msra.mxu0 0.0
    %803 = vmatpush.msra.mxu0 0.0
    %804 = vmatpush.msra.mxu0 0.0
    %805 = vmatpush.msra.mxu0 0.0
    %806 = vmatpush.msra.mxu0 0.0
    %807 = vmatpush.msra.mxu0 0.0
    %808 = vmatpush.msra.mxu0 0.0
    %809 = vmatpush.msra.mxu0 0.0
    %810 = vmatpush.msra.mxu0 0.0
    %811 = vmatpush.msra.mxu0 0.0
    %812 = vmatpush.msra.mxu0 0.0
    %813 = vmatpush.msra.mxu0 0.0
    %814 = vmatpush.msra.mxu0 %v792
    %815 = vmatpush.msra.mxu0 %v790
    %816 = vmatmul.f32.gmra.mxu0 %v795
    %v817 = vpop.f32.mrf.mxu0
    %v818 = vadd.f32 0.0, %v817
    %819 = vmatmul.f32.gmra.mxu0 %v798
    %v820 = vpop.f32.mrf.mxu0
    %v821 = vadd.f32 0.0, %v820
    %822 = vdwg.mxu0
    %823 = vmatpush.msra.mxu0 0.0
    %824 = vmatpush.msra.mxu0 0.0
    %825 = vmatpush.msra.mxu0 0.0
    %826 = vmatpush.msra.mxu0 0.0
    %827 = vmatpush.msra.mxu0 0.0
    %828 = vmatpush.msra.mxu0 0.0
    %829 = vmatpush.msra.mxu0 0.0
    %830 = vmatpush.msra.mxu0 0.0
    %831 = vmatpush.msra.mxu0 0.0
    %832 = vmatpush.msra.mxu0 0.0
    %833 = vmatpush.msra.mxu0 0.0
    %834 = vmatpush.msra.mxu0 0.0
    %835 = vmatpush.msra.mxu0 0.0
    %836 = vmatpush.msra.mxu0 0.0
    %837 = vmatpush.msra.mxu0 %v793
    %838 = vmatpush.msra.mxu0 %v791
    %839 = vmatmul.f32.gmra.mxu0 %v795
    %v840 = vpop.f32.mrf.mxu0
    %v841 = vadd.f32 0.0, %v840
    %842 = vmatmul.f32.gmra.mxu0 %v798
    %v843 = vpop.f32.mrf.mxu0
    %v844 = vadd.f32 0.0, %v843
    %845 = vdwg.mxu0
    %vm846 = vcmask 7168
    %v847 = vsel %vm846, %v818, -inf
    %v848 = vsel %vm846, %v821, -inf
    %v849 = vmax.f32 %v847, %v848
    %v850 = vrot.slane %v849, 4
    %v851 = vmax.f32 %v849, %v850
    %v852 = vrot.slane %v851, 2
    %v853 = vmax.f32 %v851, %v852
    %v854 = vrot.slane %v853, 1
    %v855 = vmax.f32 %v853, %v854
    %v856 = vsub.f32 %v818, %v855
    %v857 = vsub.f32 %v821, %v855
    %v858 = vmul.f32 %v856, 1.442695
    %v859 = vpow.pop %v858
    %v860 = vmul.f32 %v857, 1.442695
    %v861 = vpow.pop %v860
    %v862 = vsel %vm846, %v859, 0.0
    %v863 = vsel %vm846, %v861, 0.0
    %v864 = vadd.f32 %v862, %v863
    %v865 = vrot.slane %v864, 4
    %v866 = vadd.f32 %v864, %v865
    %v867 = vrot.slane %v866, 2
    %v868 = vadd.f32 %v866, %v867
    %v869 = vrot.slane %v868, 1
    %v870 = vadd.f32 %v868, %v869
    %v871 = vrcp.pop %v870
    %v872 = vmul.f32 %v870, %v871
    %v873 = vsub.f32 1.0, %v872
    %v874 = vmul.f32 %v871, %v873
    %v875 = vadd.f32 %v871, %v874
    %vm876 = vweird.f32 %v870
    %vm877 = vweird.f32 %v871
    %vm878 = vmor %vm876, %vm877
    %v879 = vsel %vm878, %v871, %v875
    %v880 = vand.u32 2147483647, %v870
    %vm881 = vcmp.eq.f32.partialorder %v880, 8.507059e+37
    %v882 = vand.u32 %v870, 2147483648
    %v883 = vor.u32 1.1754944e-38, %v882
    %v884 = vsel %vm881, %v883, %v879
    %v885 = vmul.f32 %v859, %v884
    %v886 = vmul.f32 %v861, %v884
    %888 = vset.pattern.permute.xlu0 0
    %889 = vperm.xlu0 %888, %v885
    %v890 = vpop.permute.xlu0 %889
    %893 = vset.pattern.permute.xlu0 0
    %894 = vperm.xlu0 %893, %v886
    %v895 = vpop.permute.xlu0 %894
    %v897 = vmul.f32 %v890, %v841
    %v898 = vmul.f32 %v895, %v844
    %v899 = vadd.f32 %v897, %v898
    %v900 = vrot.slane %v899, 4
    %v901 = vadd.f32 %v899, %v900
    %v902 = vrot.slane %v901, 2
    %v903 = vadd.f32 %v901, %v902
    %v904 = vrot.slane %v903, 1
    %v905 = vadd.f32 %v903, %v904
    %v906 = vadd.f32 %v550, %v905
    %v907 = vld [vmem:[#allocation7 + $0xa0] ss:$0 sm:$0xff]
    %v908 = vadd.f32 %v906, %v907
    %v909 = vmul.f32 %v908, 0.33333334
    %910 = vst [vmem:[#allocation8] sm:$0x1] %v909
    // Predicated region
    $region26: #{tpu_custom_call.1} parent=1 // pred_check
      _
    $region27: #{tpu_custom_call.1} parent=1 // pred_check_branch
      %912 = sbr.rel (0) target = $region29
    $region28: #{tpu_custom_call.1} parent=1 // pred_region
      %914 = vsyncadd [#allocation4], 0
      %s916 = sshll.u32 [#allocation8], 4
      %s917 = int_to_ptr.vmem [resolvable:$true] %s916
      %s918 = sshll.u32 %s3, 4
      %s919 = int_to_ptr.hbm [resolvable:$true] %s918
      %921 = dma.vmem_to_hbm [thread:$0]  %s917, 16, %s919, [#allocation4]
    $region29: #{tpu_custom_call.1} parent=1 // pred_fallthru
      _
    // Predicated region
    $region30: #{tpu_custom_call.1} parent=1 // pred_check
      _
    $region31: #{tpu_custom_call.1} parent=1 // pred_check_branch
      %923 = sbr.rel (0) target = $region33
    $region32: #{tpu_custom_call.1} parent=1 // pred_region
      %925 = dma.done [#allocation4], 16
    $region33: #{tpu_custom_call.1} parent=1 // pred_fallthru
      _
    %926 = vsyncpa [#allocation3], 1
    %927 = vsyncpa [#allocation6], 1
    %928 = vsyncpa [#allocation4], 1

</llo_original>
